<compile_context>
chip_gen: v7x
topology: tpu7x:2x2x1
jax: 0.10.0
libtpu: 0.0.40
codegen_flags: <defaults>
</compile_context>

<pallas_src>
import functools

import jax
import jax.numpy as jnp
from jax.experimental import pallas as pl
from jax.experimental.pallas import tpu as pltpu


def _round_up(x, m):
    return ((x + m - 1) // m) * m


# --------------------------------------------------------------------------
# Kernel: fused gate+classifier matmul -> |cls * silu(gate)| -> softmax (f32)
# --------------------------------------------------------------------------
def _router_scores_kernel(x_ref, w_ref, o_ref, *, n_experts):
    ep = o_ref.shape[-1]                          # padded expert count (x128)
    x = x_ref[...].astype(jnp.bfloat16)           # bf16 MXU operand
    # Single fused matmul: (TM, D) @ (D, 2*Ep) -> (TM, 2*Ep), f32 accumulate.
    gc = jnp.dot(x, w_ref[...], preferred_element_type=jnp.float32)
    g = gc[:, :ep]                                # gate(x)  (lane-aligned half)
    c = gc[:, ep:]                                # cls(x)   (lane-aligned half)
    sig = 1.0 / (1.0 + jnp.exp(-g))               # sigmoid (EUP exp)
    s = jnp.abs(c * (g * sig))                    # |cls * silu(gate)|, f32
    if n_experts < ep:                            # mask padded expert lanes
        lane = jax.lax.broadcasted_iota(jnp.int32, s.shape, 1)
        s = jnp.where(lane < n_experts, s, jnp.float32(-1e30))
    # softmax in f32 (matches torch softmax(dim=-1, dtype=float32))
    m = jnp.max(s, axis=-1, keepdims=True)
    e = jnp.exp(s - m)
    denom = jnp.sum(e, axis=-1, keepdims=True)
    o_ref[...] = e * pl.reciprocal(denom, approx=False)   # exact; EUP slot


def router_scores(x, w_fused, *, n_experts, tm=256):
    """x: (T, D); w_fused: (D, 2*E_pad) bf16.  Returns f32 (T, E_pad) scores.

    Padded expert columns (>= n_experts) are exactly zero.
    """
    T, D = x.shape
    e2p = w_fused.shape[1]
    ep = e2p // 2

    # Token tile: multiple of 8, <= tm, and capped at ceil(T/2) so there are at
    # least two grid steps (both v7x TensorCores busy) whenever T >= 16.
    tm_eff = max(8, min(tm, _round_up(pl.cdiv(T, 2), 8)))
    grid = (pl.cdiv(T, tm_eff),)

    x_bytes = x.dtype.itemsize
    # Double-buffered x tile + resident fused weight (x2) + output tile (x2).
    vmem_need = (2 * tm_eff * D * x_bytes
                 + 2 * D * e2p * 2
                 + 2 * tm_eff * ep * 4)
    vmem_limit = int(min(64 << 20, max(32 << 20, 2 * vmem_need)))

    cost = pl.CostEstimate(
        flops=2 * T * D * e2p,
        transcendentals=2 * T * ep,                      # sigmoid + softmax exp
        bytes_accessed=T * D * x_bytes + D * e2p * 2 + T * ep * 4,
    )

    kernel = functools.partial(_router_scores_kernel, n_experts=n_experts)
    return pl.pallas_call(
        kernel,
        grid=grid,
        in_specs=[
            pl.BlockSpec((tm_eff, D), lambda i: (i, 0)),   # token tile of x
            pl.BlockSpec((D, e2p), lambda i: (0, 0)),      # resident fused W
        ],
        out_specs=pl.BlockSpec((tm_eff, ep), lambda i: (i, 0)),
        out_shape=jax.ShapeDtypeStruct((T, ep), jnp.float32),
        compiler_params=pltpu.CompilerParams(
            dimension_semantics=("parallel",),
            vmem_limit_bytes=vmem_limit,
        ),
        cost_estimate=cost,
    )(x, w_fused)


# --------------------------------------------------------------------------
# Router.forward: scores kernel + tiny (T, E) bias / top-k / gather in JAX
# --------------------------------------------------------------------------
@functools.partial(jax.jit, static_argnames=("topk",))
def router_forward(x, w_fused, extra_scale, extra_bias, *, topk):
    """x: (T, D). Returns (weights, indices) exactly like the PyTorch module."""
    n_experts = extra_bias.shape[0]
    scores = router_scores(x, w_fused, n_experts=n_experts)[:, :n_experts]
    biased = scores + extra_bias.astype(jnp.float32)[None, :]
    _, indices = jax.lax.top_k(biased, topk)                     # (T, k)
    orig = 1.0 + scores * extra_scale.astype(jnp.float32)[None, :]
    weights = jnp.take_along_axis(orig, indices, axis=1).astype(x.dtype)
    return weights, indices


# --------------------------------------------------------------------------
# Deterministic parameter init (PyTorch nn.Linear default: U(-1/sqrt(D), ...))
# --------------------------------------------------------------------------
def init_params(key, hidden, n_experts):
    kg, kc, ks, kb = jax.random.split(key, 4)
    bound = 1.0 / (hidden ** 0.5)
    w_gate = jax.random.uniform(kg, (hidden, n_experts), jnp.float32,
                                -bound, bound)
    w_cls = jax.random.uniform(kc, (hidden, n_experts), jnp.float32,
                               -bound, bound)
    # Fused, lane-aligned, bf16 weight: gate in cols [0:E), cls in [Ep:Ep+E).
    ep = _round_up(n_experts, 128)
    w_fused = jnp.zeros((hidden, 2 * ep), jnp.bfloat16)
    w_fused = w_fused.at[:, :n_experts].set(w_gate.astype(jnp.bfloat16))
    w_fused = w_fused.at[:, ep:ep + n_experts].set(w_cls.astype(jnp.bfloat16))
    # The torch module initializes these to zeros; use small non-zero values so
    # the bias-add / scale path is actually exercised by the test.
    extra_scale = (0.05 * jax.random.normal(ks, (n_experts,))).astype(
        jnp.bfloat16)
    extra_bias = 0.01 * jax.random.normal(kb, (n_experts,)).astype(jnp.float32)
    return dict(w_gate=w_gate, w_cls=w_cls, w_fused=w_fused,
                extra_scale=extra_scale, extra_bias=extra_bias)


# --------------------------------------------------------------------------
# Plain-JAX reference mirroring the PyTorch forward (and kernel numerics:
# bf16 matmul operands, f32 accumulation), for verification
# --------------------------------------------------------------------------
def reference_router(x, wg, wc, extra_scale, extra_bias, topk):
    xb = x.astype(jnp.bfloat16)
    g = jnp.dot(xb, wg.astype(jnp.bfloat16),
                preferred_element_type=jnp.float32)
    c = jnp.dot(xb, wc.astype(jnp.bfloat16),
                preferred_element_type=jnp.float32)
    sig = 1.0 / (1.0 + jnp.exp(-g))
    s = jnp.abs(c * (g * sig)).astype(jnp.float32)
    scores = jax.nn.softmax(s, axis=-1)
    biased = scores + extra_bias.astype(jnp.float32)[None, :]
    _, indices = jax.lax.top_k(biased, topk)
    orig = 1.0 + scores * extra_scale.astype(jnp.float32)[None, :]
    weights = jnp.take_along_axis(orig, indices, axis=1).astype(x.dtype)
    return weights, indices, scores, biased


if __name__ == "__main__":
    hidden_size = 32
    n_experts = 8
    n_activated = 2
    batch, seq = 2, 8
    T = batch * seq                                   # 16 tokens -> 2 grid steps

    key = jax.random.PRNGKey(0)
    kp, kx = jax.random.split(key)
    params = init_params(kp, hidden_size, n_experts)
    x = jax.random.normal(kx, (T, hidden_size), jnp.float32)

    # Pallas forward
    weights, indices = router_forward(
        x, params["w_fused"], params["extra_scale"], params["extra_bias"],
        topk=n_activated)
    weights = jax.block_until_ready(weights)

    # Kernel score output (direct numerical check)
    scores_k = router_scores(x, params["w_fused"], n_experts=n_experts)
    scores_k = jax.block_until_ready(scores_k)[:, :n_experts]

    # Plain-JAX reference
    ref_w, ref_idx, ref_scores, ref_biased = reference_router(
        x, params["w_gate"], params["w_cls"],
        params["extra_scale"], params["extra_bias"], n_activated)

    # 1) softmax score tensors match
    assert jnp.allclose(scores_k, ref_scores, atol=2e-4, rtol=2e-4), \
        float(jnp.max(jnp.abs(scores_k - ref_scores)))

    # 2) top-k selection is equivalent (robust to numerical near-ties: compare
    #    the reference biased scores gathered at each index set)
    sel_k = jnp.take_along_axis(ref_biased, indices, axis=1)
    sel_r = jnp.take_along_axis(ref_biased, ref_idx, axis=1)
    assert jnp.allclose(sel_k, sel_r, atol=1e-4), \
        float(jnp.max(jnp.abs(sel_k - sel_r)))

    # 3) routed weights match the reference gathered at the kernel's indices
    ref_orig = 1.0 + ref_scores * params["extra_scale"].astype(
        jnp.float32)[None, :]
    ref_w_at_k = jnp.take_along_axis(ref_orig, indices, axis=1).astype(x.dtype)
    assert jnp.allclose(weights, ref_w_at_k, atol=2e-4, rtol=2e-4), \
        float(jnp.max(jnp.abs(weights - ref_w_at_k)))

    assert weights.shape == (T, n_activated)
    assert indices.shape == (T, n_activated)
    print("KERNEL_OK")
</pallas_src>

<mosaic_0001>
module attributes {stable_mosaic.version = 11 : i64} {
  func.func @_router_scores_kernel(%arg0: i32, %arg1: memref<8x32xf32, #tpu.memory_space<vmem>>, %arg2: memref<32x256xbf16, #tpu.memory_space<vmem>>, %arg3: memref<8x128xf32, #tpu.memory_space<vmem>>) attributes {dimension_semantics = [#tpu.dimension_semantics<parallel>], iteration_bounds = array<i64: 2>, scalar_prefetch = 0 : i64, scratch_operands = 0 : i64, tpu.core_type = #tpu.core_type<tc>, window_params = [{transform_indices = @transform_0, window_bounds = array<i64: 8, 32>}, {pipeline_mode = #tpu.pipeline_mode<synchronous>, transform_indices = @transform_1, window_bounds = array<i64: 32, 256>}, {transform_indices = @transform_2, window_bounds = array<i64: 8, 128>}]} {
    %c0 = arith.constant 0 : index
    %c0_0 = arith.constant 0 : index
    %0 = vector.load %arg1[%c0, %c0_0] : memref<8x32xf32, #tpu.memory_space<vmem>>, vector<8x32xf32>
    %1 = arith.truncf %0 : vector<8x32xf32> to vector<8x32xbf16>
    %c0_1 = arith.constant 0 : index
    %c0_2 = arith.constant 0 : index
    %2 = vector.load %arg2[%c0_1, %c0_2] : memref<32x256xbf16, #tpu.memory_space<vmem>>, vector<32x256xbf16>
    %cst = arith.constant dense<0.000000e+00> : vector<8x256xf32>
    %3 = tpu.matmul %1, %2, %cst {dimension_numbers = #tpu.dot_dimension_numbers<[1], [0], [0], [1], [0, 0, 1, 1], [], []>} : vector<8x32xbf16>, vector<32x256xbf16>, vector<8x256xf32> -> vector<8x256xf32>
    %4 = vector.extract_strided_slice %3 {offsets = [0, 0], sizes = [8, 128], strides = [1, 1]} : vector<8x256xf32> to vector<8x128xf32>
    %5 = vector.extract_strided_slice %3 {offsets = [0, 128], sizes = [8, 128], strides = [1, 1]} : vector<8x256xf32> to vector<8x128xf32>
    %cst_3 = arith.constant 0.000000e+00 : f32
    %6 = vector.broadcast %cst_3 : f32 to vector<8x128xf32>
    %7 = arith.subf %6, %4 : vector<8x128xf32>
    %8 = math.exp %7 : vector<8x128xf32>
    %cst_4 = arith.constant 1.000000e+00 : f32
    %9 = vector.broadcast %cst_4 : f32 to vector<8x128xf32>
    %10 = arith.addf %9, %8 : vector<8x128xf32>
    %cst_5 = arith.constant 1.000000e+00 : f32
    %11 = vector.broadcast %cst_5 : f32 to vector<8x128xf32>
    %12 = arith.divf %11, %10 : vector<8x128xf32>
    %13 = arith.mulf %4, %12 : vector<8x128xf32>
    %14 = arith.mulf %5, %13 : vector<8x128xf32>
    %15 = math.absf %14 : vector<8x128xf32>
    %16 = tpu.iota {dimensions = array<i32: 1>} : vector<8x128xi32>
    %c8_i32 = arith.constant 8 : i32
    %17 = vector.broadcast %c8_i32 : i32 to vector<8x128xi32>
    %18 = arith.cmpi slt, %16, %17 : vector<8x128xi32>
    %cst_6 = arith.constant -1.000000e+30 : f32
    %19 = vector.broadcast %cst_6 : f32 to vector<8x128xf32>
    %20 = arith.select %18, %15, %19 : vector<8x128xi1>, vector<8x128xf32>
    %cst_7 = arith.constant dense<0xFF800000> : vector<8xf32>
    %21 = vector.multi_reduction <maximumf>, %20, %cst_7 [1] : vector<8x128xf32> to vector<8xf32>
    %22 = vector.shape_cast %21 : vector<8xf32> to vector<8x1xf32>
    %23 = vector.broadcast %22 : vector<8x1xf32> to vector<8x128xf32>
    %24 = arith.subf %20, %23 : vector<8x128xf32>
    %25 = math.exp %24 : vector<8x128xf32>
    %cst_8 = arith.constant dense<0.000000e+00> : vector<8xf32>
    %26 = vector.multi_reduction <add>, %25, %cst_8 [1] : vector<8x128xf32> to vector<8xf32>
    %27 = vector.shape_cast %26 : vector<8xf32> to vector<8x1xf32>
    %28 = tpu.reciprocal %27 : vector<8x1xf32> -> vector<8x1xf32>
    %29 = vector.broadcast %28 : vector<8x1xf32> to vector<8x128xf32>
    %30 = arith.mulf %25, %29 : vector<8x128xf32>
    %c0_9 = arith.constant 0 : index
    %c0_10 = arith.constant 0 : index
    %31 = vector.load %arg3[%c0_9, %c0_10] : memref<8x128xf32, #tpu.memory_space<vmem>>, vector<8x128xf32>
    tpu.vector_store %arg3[%c0_9, %c0_10], %30 {strides = array<i32>} : memref<8x128xf32, #tpu.memory_space<vmem>>, vector<8x128xf32>,
    return
  }
  func.func @transform_0(%arg0: i32) -> (i32, i32) {
    %c0_i32 = arith.constant 0 : i32
    %c0_i32_0 = arith.constant 0 : i32
    return %arg0, %c0_i32 : i32, i32
  }
  func.func @transform_1(%arg0: i32) -> (i32, i32) {
    %c0_i32 = arith.constant 0 : i32
    %c0_i32_0 = arith.constant 0 : i32
    %c0_i32_1 = arith.constant 0 : i32
    return %c0_i32, %c0_i32_0 : i32, i32
  }
  func.func @transform_2(%arg0: i32) -> (i32, i32) {
    %c0_i32 = arith.constant 0 : i32
    %c0_i32_0 = arith.constant 0 : i32
    return %arg0, %c0_i32 : i32, i32
  }
}

</mosaic_0001>

<llo_original>
// kernel: router_forward.1
$region0: #{router_forward.1}
  #allocation0 [shape = 'u32[]', space=smem, size = 0x4, offset = 0x4, fixed_abs, tag = 'smem constant byte address 0x4 - core index']
  #allocation1 [shape = 'u32[144,128]{1,0:T(1,128)}', space=vmem, size = 0x12000, scoped, tag = 'internal scratch']
  %s0 = inlined_call_operand.hbm [shape: f32[16,32], index: 0, kind: input, shape index: {}]
  %s1 = inlined_call_operand.hbm [shape: bf16[32,256], index: 1, kind: input, shape index: {}]
  %s2 = inlined_call_operand.vmem [shape: f32[16,128], index: 2, kind: output, shape index: {}]
  %s3 = sld [smem:[#allocation0]]
  $region49: #{router_forward.1} parent=0
    _
  %s5 = ssub.s32 1, %s3
  %s6 = scalar_select 0, %s5, %s3
  $region1: #{router_forward.1} parent=0
    #allocation2 [shape = 'u8[8192]{0}', space=vmem, size = 0x2000, scoped, tag = 'input window, operand 0']
    #allocation3 [shape = 's32[2]{0}', space=sflag, size = 0x8, scoped, tag = 'scoped memory for router_forward.1']
    #allocation4 [shape = 'u8[16384]{0}', space=vmem, size = 0x4000, scoped, tag = 'input window, operand 1, single buffered']
    #allocation5 [shape = 's32[1]{0}', space=sflag, size = 0x4, scoped, tag = 'scoped memory for router_forward.1']
    %7 = vsyncpa [#allocation3], 0
    %s8 = scalar_lea.sflag [#allocation3], 1
    %9 = vsyncpa %s8, 0
    %10 = vsyncpa [#allocation5], 0
    loop: start=0, step=1, limit=4
    $region2: #{router_forward.1} parent=1 // loop_pre_header
      _
    $region3: #{router_forward.1} parent=1 // loop_header
      %s12 = sphi 0, %s16
      %p13 = scmp.ge.s32.totalorder %s12, 4
      %s22 = sphi 0, %s24
      %s25 = sphi 0, %s22
      %s26 = sphi 0, %s25
      %s42 = sphi 0, %s26
      %s46 = sphi 0, %s46
      %s48 = sphi 0, %s46
      %s49 = sphi 0, %s48
      %s63 = sphi 0, %s49
      %s69 = sphi 0, %s71
      %s72 = sphi 0, %s69
      %s73 = sphi 0, %s72
      %s89 = sphi 0, %s73
    $region4: #{router_forward.1} parent=1 // loop_header_branch
      %15 = sbr.rel (%p13) target = $region8
    $region5: #{router_forward.1} parent=1 // loop_body
      %s17 = ssub.s32 %s12, 1
      %s18 = ssub.s32 %s12, 2
      %s19 = sadd.s32 %s12, 1
      %s20 = ssub.s32 %s12, %s19
      %p21 = scmp.eq.s32.totalorder %s20, 0
      %s23 = sadd.s32 %s22, 1
      %s24 = scalar_select %p21, %s22, %s23
      %p27 = pneg %p21
      %p28 = scmp.eq.s32.totalorder %s12, 1
      %p29 = por %p27, %p28
      %p30 = scmp.ne.s32.totalorder %s22, %s25
      %p31 = scmp.eq.s32.totalorder %s12, 0
      %p32 = por %p30, %p31
      %p33 = scmp.ne.s32.totalorder %s22, %s25
      %p34 = scmp.eq.s32.totalorder %s17, 1
      %p35 = por %p33, %p34
      %p36 = scmp.ne.s32.totalorder %s25, %s26
      %p37 = scmp.eq.s32.totalorder %s17, 0
      %p38 = por %p36, %p37
      %p39 = scmp.ne.s32.totalorder %s25, %s26
      %p40 = scmp.eq.s32.totalorder %s18, 1
      %p41 = por %p39, %p40
      %p43 = scmp.ne.s32.totalorder %s26, %s42
      %p44 = scmp.eq.s32.totalorder %s18, 0
      %p45 = por %p43, %p44
      %s47 = sadd.s32 %s46, 1
      %p50 = scmp.eq.s32.totalorder %s12, 1
      %p51 = scmp.ne.s32.totalorder %s46, %s48
      %p52 = scmp.eq.s32.totalorder %s12, 0
      %p53 = por %p51, %p52
      %p54 = scmp.ne.s32.totalorder %s46, %s48
      %p55 = scmp.eq.s32.totalorder %s17, 1
      %p56 = por %p54, %p55
      %p57 = scmp.ne.s32.totalorder %s48, %s49
      %p58 = scmp.eq.s32.totalorder %s17, 0
      %p59 = por %p57, %p58
      %p60 = scmp.ne.s32.totalorder %s48, %s49
      %p61 = scmp.eq.s32.totalorder %s18, 1
      %p62 = por %p60, %p61
      %p64 = scmp.ne.s32.totalorder %s49, %s63
      %p65 = scmp.eq.s32.totalorder %s18, 0
      %p66 = por %p64, %p65
      %s67 = ssub.s32 %s12, %s19
      %p68 = scmp.eq.s32.totalorder %s67, 0
      %s70 = sadd.s32 %s69, 1
      %s71 = scalar_select %p68, %s69, %s70
      %p74 = pneg %p68
      %p75 = scmp.eq.s32.totalorder %s12, 1
      %p76 = por %p74, %p75
      %p77 = scmp.ne.s32.totalorder %s69, %s72
      %p78 = scmp.eq.s32.totalorder %s12, 0
      %p79 = por %p77, %p78
      %p80 = scmp.ne.s32.totalorder %s69, %s72
      %p81 = scmp.eq.s32.totalorder %s17, 1
      %p82 = por %p80, %p81
      %p83 = scmp.ne.s32.totalorder %s72, %s73
      %p84 = scmp.eq.s32.totalorder %s17, 0
      %p85 = por %p83, %p84
      %p86 = scmp.ne.s32.totalorder %s72, %s73
      %p87 = scmp.eq.s32.totalorder %s18, 1
      %p88 = por %p86, %p87
      %p90 = scmp.ne.s32.totalorder %s73, %s89
      %p91 = scmp.eq.s32.totalorder %s18, 0
      %p92 = por %p90, %p91
      %p93 = scmp.le.s32.totalorder 1, %s12
      %p94 = scmp.lt.s32.totalorder %s12, 3
      %p95 = pnand %p93, %p94
      %p96 = pneg %p95
      // Predicated region
      $region9: #{router_forward.1} parent=5 // pred_check
        _
      $region10: #{router_forward.1} parent=5 // pred_check_branch
        %98 = sbr.rel (%p95) target = $region12
      $region11: #{router_forward.1} parent=5 // pred_region
        %s99 = ssub.s32 %s12, 1
        // Predicated region
        $region13: #{router_forward.1} parent=11 // pred_check
          %p100 = pneg %p59
        $region14: #{router_forward.1} parent=11 // pred_check_branch
          %102 = sbr.rel (%p100) target = $region16
        $region15: #{router_forward.1} parent=11 // pred_region
          %s104 = ssub.s32 512, 512
          %105 = vsyncadd [#allocation5], %s104
          %s106 = sshll.u32 [#allocation4], 4
          %s107 = int_to_ptr.vmem [resolvable:$true] %s106
          %112 = dma.hbm_to_vmem [thread:$0]  %s1, 512, %s107, [#allocation5], 128, 128, 8
        $region16: #{router_forward.1} parent=11 // pred_fallthru
          _
      $region12: #{router_forward.1} parent=5 // pred_fallthru
        _
      %p113 = scmp.lt.s32.totalorder %s12, 2
      // Predicated region
      $region17: #{router_forward.1} parent=5 // pred_check
        %p114 = pneg %p113
      $region18: #{router_forward.1} parent=5 // pred_check_branch
        %116 = sbr.rel (%p114) target = $region20
      $region19: #{router_forward.1} parent=5 // pred_region
        // Predicated region
        $region21: #{router_forward.1} parent=19 // pred_check
          %p117 = pneg %p32
        $region22: #{router_forward.1} parent=19 // pred_check_branch
          %119 = sbr.rel (%p117) target = $region24
        $region23: #{router_forward.1} parent=19 // pred_region
          %s120 = sand.u32 %s22, 1
          %s121 = scalar_lea.sflag [#allocation3], %s120
          %s122 = sand.u32 %s22, 1
          %s123 = smul.addr %s122, 8
          %s124 = scalar_lea.vmem [#allocation2], %s123
          %s126 = ssub.s32 128, 128
          %127 = vsyncadd %s121, %s126
          %s128 = smul.addr %s12, 128
          %s129 = scalar_lea.hbm %s0, %s128
          %s131 = sshll.u32 %s124, 4
          %s132 = int_to_ptr.vmem [resolvable:$true] %s131
          %134 = dma.hbm_to_vmem [thread:$0]  %s129, 128, %s132, %s121
        $region24: #{router_forward.1} parent=19 // pred_fallthru
          _
      $region20: #{router_forward.1} parent=5 // pred_fallthru
        _
      %p135 = scmp.le.s32.totalorder 1, %s12
      %p136 = scmp.lt.s32.totalorder %s12, 3
      %p137 = pnand %p135, %p136
      %p138 = pneg %p137
      // Predicated region
      $region25: #{router_forward.1} parent=5 // pred_check
        _
      $region26: #{router_forward.1} parent=5 // pred_check_branch
        %140 = sbr.rel (%p137) target = $region28
      $region27: #{router_forward.1} parent=5 // pred_region
        %s141 = ssub.s32 %s12, 1
        %s142 = sand.u32 %s25, 1
        %s143 = scalar_lea.sflag [#allocation3], %s142
        %s144 = sand.u32 %s25, 1
        %s145 = smul.addr %s144, 8
        %s146 = scalar_lea.vmem [#allocation2], %s145
        // Predicated region
        $region29: #{router_forward.1} parent=27 // pred_check
          %p147 = pneg %p38
        $region30: #{router_forward.1} parent=27 // pred_check_branch
          %149 = sbr.rel (%p147) target = $region32
        $region31: #{router_forward.1} parent=27 // pred_region
          %150 = dma.done %s143, 128
        $region32: #{router_forward.1} parent=27 // pred_fallthru
          _
        // Predicated region
        $region33: #{router_forward.1} parent=27 // pred_check
          %p151 = pneg %p59
        $region34: #{router_forward.1} parent=27 // pred_check_branch
          %153 = sbr.rel (%p151) target = $region36
        $region35: #{router_forward.1} parent=27 // pred_region
          %154 = dma.done [#allocation5], 512
        $region36: #{router_forward.1} parent=27 // pred_fallthru
          _
        %s155 = sand.u32 %s25, 1
        %s156 = scalar_lea.sflag [#allocation3], %s155
        %s157 = sand.u32 %s25, 1
        %s158 = smul.addr %s157, 8
        %s159 = scalar_lea.vmem [#allocation2], %s158
        %p160 = pneg %p38
        %p161 = pneg %p35
        %p162 = pneg %p59
        %p163 = pneg %p56
        %p164 = pneg %p85
        %p165 = pneg %p82
        %p166 = scmp.lt.s32.totalorder %s17, 1
        %s167 = scalar_select %p166, %s17, 1
        %s168 = smul.addr %s167, 8
        %s169 = scalar_lea.vmem %s2, %s168
        %p170 = scmp.lt.s32.totalorder %s17, 1
        %s171 = scalar_select %p170, %s17, 1
        %s172 = smul.addr %s171, 8
        %s173 = scalar_lea.vmem %s2, %s172
        %v175 = vld [vmem:[%s146] sm:$0xff]
        %v176 = vpack.c.bf16 %v175, %v175
        %v177 = vld [vmem:[#allocation4] sm:$0xff]
        %v178 = vld [vmem:[#allocation4 + $0x8] sm:$0xff]
        %v179 = vld [vmem:[#allocation4 + $0x10] sm:$0xff]
        %v180 = vld [vmem:[#allocation4 + $0x18] sm:$0xff]
        %v185 = vunpack.c.l.b16 %v177
        %v186 = vunpack.c.h.b16 %v177
        %v187 = vunpack.c.l.b16 %v178
        %v188 = vunpack.c.h.b16 %v178
        %v189 = vunpack.c.l.b16 %v179
        %v190 = vunpack.c.h.b16 %v179
        %v191 = vunpack.c.l.b16 %v180
        %v192 = vunpack.c.h.b16 %v180
        %v193 = vpack.c.b16 %v187, %v185
        %v194 = vpack.c.b16 %v188, %v186
        %v195 = vpack.c.b16 %v191, %v189
        %v196 = vpack.c.b16 %v192, %v190
        %vm201 = vcmask 261120
        %v203 = vsel %vm201, %v176, 0
        %205 = vmatprep.subr.bf16.mxu0 %v194
        %206 = vmatpush1.bf16.msra.mxu0 %v193
        %207 = vmatprep.subr.bf16.mxu0 %v196
        %208 = vmatpush1.bf16.msra.mxu0 %v195
        %209 = vmatprep.subr.bf16.mxu0 0
        %210 = vmatpush1.bf16.msra.mxu0 0
        %211 = vmatprep.subr.bf16.mxu0 0
        %212 = vmatpush1.bf16.msra.mxu0 0
        %213 = vmatprep.subr.bf16.mxu0 0
        %214 = vmatpush1.bf16.msra.mxu0 0
        %215 = vmatprep.subr.bf16.mxu0 0
        %216 = vmatpush1.bf16.msra.mxu0 0
        %217 = vmatprep.subr.bf16.mxu0 0
        %218 = vmatpush1.bf16.msra.mxu0 0
        %219 = vmatprep.subr.bf16.mxu0 0
        %220 = vmatpush1.bf16.msra.mxu0 0
        %221 = vmatprep.subr.bf16.mxu0 0
        %222 = vmatpush1.bf16.msra.mxu0 0
        %223 = vmatprep.subr.bf16.mxu0 0
        %224 = vmatpush1.bf16.msra.mxu0 0
        %225 = vmatprep.subr.bf16.mxu0 0
        %226 = vmatpush1.bf16.msra.mxu0 0
        %227 = vmatprep.subr.bf16.mxu0 0
        %228 = vmatpush1.bf16.msra.mxu0 0
        %229 = vmatprep.subr.bf16.mxu0 0
        %230 = vmatpush1.bf16.msra.mxu0 0
        %231 = vmatprep.subr.bf16.mxu0 0
        %232 = vmatpush1.bf16.msra.mxu0 0
        %233 = vmatprep.subr.bf16.mxu0 0
        %234 = vmatpush1.bf16.msra.mxu0 0
        %235 = vmatprep.subr.bf16.mxu0 0
        %236 = vmatpush1.bf16.msra.mxu0 0
        %237 = vmatprep.mubr.bf16.mxu0 0
        %238 = vmatmul.mubr.bf16.gmra.mrb[0].mxu0 %v203
        %v239 = vpop.f32.mrb[0].mxu0
        %v240 = vadd.f32 0.0, %v239
        %v241 = vpop.f32.mrb[0].mxu0
        %v242 = vadd.f32 0.0, %v241
        %v243 = vpop.f32.mrb[0].mxu0
        %v244 = vpop.f32.mrb[0].mxu0
        %245 = vdwg.mxu0
        %v246 = vsub.f32 0.0, %v240
        %v247 = vmul.f32 %v246, 1.442695
        %v248 = vpow.pop %v247
        %v249 = vadd.f32 %v248, 1.0
        %v250 = vrcp.pop %v249
        %v251 = vmul.f32 1.0, %v250
        %v252 = vmul.f32 %v240, %v251
        %v253 = vmul.f32 %v242, %v252
        %v254 = vand.u32 2147483647, %v253
        %v255 = vlaneseq
        %v256 = vand.u32 %v255, 127
        %vm257 = vcmp.lt.s32.totalorder %v256, 8
        %v258 = vsel %vm257, %v254, -1e+30
        %259 = vmax.xlane.f32.xlu0 %v258
        %v260 = vpop.xlane.xlu0 %259
        %v261 = vsub.f32 %v258, %v260
        %v262 = vmul.f32 %v261, 1.442695
        %v263 = vpow.pop %v262
        %264 = vadd.xlane.f32.xlu0 %v263
        %v265 = vpop.xlane.xlu0 %264
        %v266 = vrcp.pop %v265
        %v267 = vmul.f32 %v263, %v266
        %268 = vst [vmem:[%s173] sm:$0xff] %v267
        %p269 = scmp.lt.s32.totalorder %s17, 1
        %s270 = scalar_select %p269, %s17, 1
        %s271 = smul.addr %s270, 8
        %s272 = scalar_lea.vmem %s2, %s271
        // Predicated region
        $region37: #{router_forward.1} parent=27 // pred_check
          %p273 = pneg %p82
        $region38: #{router_forward.1} parent=27 // pred_check_branch
          %275 = sbr.rel (%p273) target = $region40
        $region39: #{router_forward.1} parent=27 // pred_region
          _
        $region40: #{router_forward.1} parent=27 // pred_fallthru
          _
      $region28: #{router_forward.1} parent=5 // pred_fallthru
        _
      %p276 = scmp.le.s32.totalorder 2, %s12
      // Predicated region
      $region41: #{router_forward.1} parent=5 // pred_check
        %p277 = pneg %p276
      $region42: #{router_forward.1} parent=5 // pred_check_branch
        %279 = sbr.rel (%p277) target = $region44
      $region43: #{router_forward.1} parent=5 // pred_region
        %s280 = ssub.s32 %s12, 2
        // Predicated region
        $region45: #{router_forward.1} parent=43 // pred_check
          %p281 = pneg %p88
        $region46: #{router_forward.1} parent=43 // pred_check_branch
          %283 = sbr.rel (%p281) target = $region48
        $region47: #{router_forward.1} parent=43 // pred_region
          %p284 = scmp.lt.s32.totalorder %s18, 1
          %s285 = scalar_select %p284, %s18, 1
          %s286 = smul.addr %s285, 8
          %s287 = scalar_lea.vmem %s2, %s286
        $region48: #{router_forward.1} parent=43 // pred_fallthru
          _
      $region44: #{router_forward.1} parent=5 // pred_fallthru
        _
    $region6: #{router_forward.1} parent=1 // loop_footer
      %s16 = sadd.s32 1, %s12
    $region7: #{router_forward.1} parent=1 // loop_footer_branch
      %11 = sbr.rel target = $region3
    $region8: #{router_forward.1} parent=1 // loop_exit
      _
    %288 = vsyncpa [#allocation3], 1
    %s289 = scalar_lea.sflag [#allocation3], 1
    %290 = vsyncpa %s289, 1
    %291 = vsyncpa [#allocation5], 1

</llo_original>
